<compile_context>
chip_gen: v7x
topology: tpu7x:2x2x1
jax: 0.10.0
libtpu: 0.0.40
codegen_flags: <defaults>
</compile_context>

<pallas_src>
import math
import functools

import jax
import jax.numpy as jnp
from jax.experimental import pallas as pl
from jax.experimental.pallas import tpu as pltpu

_LANE = 128
_MAX_PLANE_TILE_BYTES = 512 * 1024      # per-plane output block cap (x2 planes, x2 buffers)
_MIN_SPLIT_TABLE_BYTES = 256 * 1024     # force >=2 grid steps above this (v7x: 2 TCs)


def _ceil_div(a: int, b: int) -> int:
    return -(-a // b)


def _pe_planes_kernel(freq_ref, posoff_ref, sin_ref, cos_ref, *, pos_per_row):
    """Emit one lane-dense tile of the de-interleaved PE planes.

    sin_ref / cos_ref tiles are (rows_per_tile, width).  Logically element
    (row, col) corresponds to position  pos = row*pos_per_row + posoff[col]
    and frequency freq[col]; both per-column tables are precomputed in the
    wrapper, so the body is pure elementwise VPU + one EUP op per element.
    """
    rows, width = sin_ref.shape
    r0 = pl.program_id(0) * rows
    row = jax.lax.broadcasted_iota(jnp.int32, (rows, width), 0) + r0
    pos = row.astype(jnp.float32) * jnp.float32(pos_per_row) + posoff_ref[...]
    angle = pos * freq_ref[...]
    sin_ref[...] = jnp.sin(angle)
    cos_ref[...] = jnp.cos(angle)


def _choose_rows_per_tile(rows: int, width: int) -> int:
    """Pick a tile height: VMEM-safe, 8-row aligned, >=2 tiles for big tables."""
    bytes_per_row = width * 4
    cap_rows = max(8, (_MAX_PLANE_TILE_BYTES // bytes_per_row) // 8 * 8)
    if rows > cap_rows:
        return cap_rows
    table_bytes = 2 * rows * bytes_per_row          # sin + cos planes
    if table_bytes > _MIN_SPLIT_TABLE_BYTES and rows > 8:
        # Split into (at least) two parallel blocks so both v7x TCs get work.
        return max(8, _ceil_div(_ceil_div(rows, 2), 8) * 8)
    return rows                                     # single block == full dims (legal)


@functools.lru_cache(maxsize=None)
def _build_pe_table(t: int, d: int) -> jax.Array:
    """Build the (1, t, d) float32 positional-encoding table with Pallas."""
    assert d % 2 == 0, "PositionalEncoding requires an even embedding dimension"
    half = d // 2

    # Lane-dense plane layout.
    if half % _LANE == 0:
        rows, width, flat = t, half, False
    elif (_LANE % half == 0) and ((t * half) % _LANE == 0):
        rows, width, flat = (t * half) // _LANE, _LANE, True
    else:
        rows, width, flat = t, half, False          # fallback: full last dim (legal)

    # Column-invariant constants, hoisted out of the kernel (one exp per
    # frequency total, no per-element exp / int div / mod in the body).
    freq = jnp.exp(jnp.arange(0, d, 2, dtype=jnp.float32)
                   * jnp.float32(-math.log(10000.0) / d))            # (half,)
    if flat:
        pos_per_row = _LANE // half
        freq_row = jnp.tile(freq, pos_per_row)[None, :]               # (1, 128)
        posoff_row = jnp.repeat(
            jnp.arange(pos_per_row, dtype=jnp.float32), half)[None, :]  # (1, 128)
    else:
        pos_per_row = 1
        freq_row = freq[None, :]                                      # (1, width)
        posoff_row = jnp.zeros((1, width), jnp.float32)

    rows_per_tile = _choose_rows_per_tile(rows, width)
    grid = (_ceil_div(rows, rows_per_tile),)

    kernel = functools.partial(_pe_planes_kernel, pos_per_row=pos_per_row)

    sin_p, cos_p = pl.pallas_call(
        kernel,
        out_shape=(jax.ShapeDtypeStruct((rows, width), jnp.float32),
                   jax.ShapeDtypeStruct((rows, width), jnp.float32)),
        grid_spec=pltpu.PrefetchScalarGridSpec(
            num_scalar_prefetch=0,
            grid=grid,
            in_specs=[pl.BlockSpec((1, width), lambda i: (0, 0)),
                      pl.BlockSpec((1, width), lambda i: (0, 0))],
            out_specs=(pl.BlockSpec((rows_per_tile, width), lambda i: (i, 0)),
                       pl.BlockSpec((rows_per_tile, width), lambda i: (i, 0))),
        ),
        compiler_params=pltpu.CompilerParams(
            dimension_semantics=("parallel",),
            vmem_limit_bytes=32 * 1024 * 1024,       # plenty of headroom, safe on all gens
        ),
        cost_estimate=pl.CostEstimate(
            flops=3 * t * half,                       # iota-add, scale+off, angle mul
            transcendentals=t * d,                    # one sin or cos per output element
            bytes_accessed=t * d * 4 + 2 * width * 4,
        ),
    )(freq_row, posoff_row)

    # Interleave the planes back: even columns = sin, odd columns = cos.
    # One-shot wrapper-side layout plumbing (the table is lru-cached).
    s = sin_p.reshape(t, half)
    c = cos_p.reshape(t, half)
    pe = jnp.stack([s, c], axis=-1).reshape(t, d)
    return pe[None, :, :]                             # (1, time, fea)


def positional_encoding(x: jax.Array) -> jax.Array:
    """Pallas equivalent of PositionalEncoding.forward.

    x : (batch, time, fea) — only the time/fea extents are used (the PyTorch
        module ignores x's values entirely).
    returns : (1, time, fea) float32 positional-encoding table.
    """
    _, t, d = x.shape
    return _build_pe_table(int(t), int(d))


def _reference_pe(t: int, d: int) -> jnp.ndarray:
    """Pure-JAX reference mirroring the PyTorch buffer construction."""
    positions = jnp.arange(t, dtype=jnp.float32)[:, None]
    denominator = jnp.exp(
        jnp.arange(0, d, 2, dtype=jnp.float32) * (-(math.log(10000.0) / d))
    )
    pe = jnp.zeros((t, d), jnp.float32)
    pe = pe.at[:, 0::2].set(jnp.sin(positions * denominator))
    pe = pe.at[:, 1::2].set(jnp.cos(positions * denominator))
    return pe[None]


if __name__ == "__main__":
    key = jax.random.PRNGKey(0)
    batch, time, fea = 2, 16, 32                 # small SepformerQ-style shapes
    x = jax.random.normal(key, (batch, time, fea), dtype=jnp.float32)

    out = jax.block_until_ready(positional_encoding(x))
    ref = _reference_pe(time, fea)
    assert out.shape == (1, time, fea), out.shape
    assert jnp.allclose(out, ref, atol=1e-5, rtol=1e-5), "mismatch vs reference"

    # Direct lane-dense path (fea/2 == 128) with a non-multiple-of-8 time.
    x2 = jnp.zeros((1, 40, 256), dtype=jnp.float32)
    out2 = jax.block_until_ready(positional_encoding(x2))
    assert out2.shape == (1, 40, 256)
    assert jnp.allclose(out2, _reference_pe(40, 256), atol=1e-5, rtol=1e-5)

    # Multi-tile grid (>=2 parallel blocks) on the direct path; larger angles,
    # so allow a few-ulp slack between the Mosaic and XLA sin/cos lowerings.
    x3 = jnp.zeros((1, 1024, 256), dtype=jnp.float32)
    out3 = jax.block_until_ready(positional_encoding(x3))
    assert out3.shape == (1, 1024, 256)
    assert jnp.allclose(out3, _reference_pe(1024, 256), atol=1e-4, rtol=1e-5)

    # Flat lane-dense path (fea/2 == 32 -> flattened to 128-lane rows).
    x4 = jnp.zeros((1, 512, 64), dtype=jnp.float32)
    out4 = jax.block_until_ready(positional_encoding(x4))
    assert out4.shape == (1, 512, 64)
    assert jnp.allclose(out4, _reference_pe(512, 64), atol=1e-4, rtol=1e-5)

    print("KERNEL_OK")
</pallas_src>

<mosaic_0001>
module attributes {stable_mosaic.version = 11 : i64} {
  func.func @_pe_planes_kernel(%arg0: i32, %arg1: memref<1x128xf32, #tpu.memory_space<vmem>>, %arg2: memref<1x128xf32, #tpu.memory_space<vmem>>, %arg3: memref<2x128xf32, #tpu.memory_space<vmem>>, %arg4: memref<2x128xf32, #tpu.memory_space<vmem>>) attributes {dimension_semantics = [#tpu.dimension_semantics<parallel>], iteration_bounds = array<i64: 1>, scalar_prefetch = 0 : i64, scratch_operands = 0 : i64, tpu.core_type = #tpu.core_type<tc>, window_params = [{pipeline_mode = #tpu.pipeline_mode<synchronous>, transform_indices = @transform_0, window_bounds = array<i64: 1, 128>}, {pipeline_mode = #tpu.pipeline_mode<synchronous>, transform_indices = @transform_1, window_bounds = array<i64: 1, 128>}, {transform_indices = @transform_2, window_bounds = array<i64: 2, 128>}, {transform_indices = @transform_3, window_bounds = array<i64: 2, 128>}]} {
    %c2_i32 = arith.constant 2 : i32
    %0 = arith.muli %arg0, %c2_i32 : i32
    %1 = tpu.iota {dimensions = array<i32: 0>} : vector<2x128xi32>
    %2 = vector.broadcast %0 : i32 to vector<2x128xi32>
    %3 = arith.addi %1, %2 : vector<2x128xi32>
    %4 = arith.sitofp %3 : vector<2x128xi32> to vector<2x128xf32>
    %cst = arith.constant 8.000000e+00 : f32
    %5 = vector.broadcast %cst : f32 to vector<2x128xf32>
    %6 = arith.mulf %4, %5 : vector<2x128xf32>
    %c0 = arith.constant 0 : index
    %c0_0 = arith.constant 0 : index
    %7 = vector.load %arg2[%c0, %c0_0] : memref<1x128xf32, #tpu.memory_space<vmem>>, vector<1x128xf32>
    %8 = vector.broadcast %7 : vector<1x128xf32> to vector<2x128xf32>
    %9 = arith.addf %6, %8 : vector<2x128xf32>
    %c0_1 = arith.constant 0 : index
    %c0_2 = arith.constant 0 : index
    %10 = vector.load %arg1[%c0_1, %c0_2] : memref<1x128xf32, #tpu.memory_space<vmem>>, vector<1x128xf32>
    %11 = vector.broadcast %10 : vector<1x128xf32> to vector<2x128xf32>
    %12 = arith.mulf %9, %11 : vector<2x128xf32>
    %13 = math.sin %12 : vector<2x128xf32>
    %c0_3 = arith.constant 0 : index
    %c0_4 = arith.constant 0 : index
    %14 = vector.load %arg3[%c0_3, %c0_4] : memref<2x128xf32, #tpu.memory_space<vmem>>, vector<2x128xf32>
    tpu.vector_store %arg3[%c0_3, %c0_4], %13 {strides = array<i32>} : memref<2x128xf32, #tpu.memory_space<vmem>>, vector<2x128xf32>,
    %15 = math.cos %12 : vector<2x128xf32>
    %c0_5 = arith.constant 0 : index
    %c0_6 = arith.constant 0 : index
    %16 = vector.load %arg4[%c0_5, %c0_6] : memref<2x128xf32, #tpu.memory_space<vmem>>, vector<2x128xf32>
    tpu.vector_store %arg4[%c0_5, %c0_6], %15 {strides = array<i32>} : memref<2x128xf32, #tpu.memory_space<vmem>>, vector<2x128xf32>,
    return
  }
  func.func @transform_0(%arg0: i32) -> (i32, i32) {
    %c0_i32 = arith.constant 0 : i32
    %c0_i32_0 = arith.constant 0 : i32
    %c0_i32_1 = arith.constant 0 : i32
    return %c0_i32, %c0_i32_0 : i32, i32
  }
  func.func @transform_1(%arg0: i32) -> (i32, i32) {
    %c0_i32 = arith.constant 0 : i32
    %c0_i32_0 = arith.constant 0 : i32
    %c0_i32_1 = arith.constant 0 : i32
    return %c0_i32, %c0_i32_0 : i32, i32
  }
  func.func @transform_2(%arg0: i32) -> (i32, i32) {
    %c0_i32 = arith.constant 0 : i32
    %c0_i32_0 = arith.constant 0 : i32
    return %arg0, %c0_i32 : i32, i32
  }
  func.func @transform_3(%arg0: i32) -> (i32, i32) {
    %c0_i32 = arith.constant 0 : i32
    %c0_i32_0 = arith.constant 0 : i32
    return %arg0, %c0_i32 : i32, i32
  }
}

</mosaic_0001>

<llo_original>
// kernel: tpu_custom_call.1
$region0: #{tpu_custom_call.1}
  #allocation0 [shape = 'u32[]', space=smem, size = 0x4, offset = 0x4, fixed_abs, tag = 'smem constant byte address 0x4 - core index']
  #allocation1 [shape = 'u32[144,128]{1,0:T(1,128)}', space=vmem, size = 0x12000, scoped, tag = 'internal scratch']
  %s0 = inlined_call_operand.hbm [shape: f32[1,128], index: 0, kind: input, shape index: {}]
  %s1 = inlined_call_operand.vmem [shape: f32[1,128], index: 1, kind: input, shape index: {}]
  %s2 = inlined_call_operand.hbm [shape: f32[2,128], index: 2, kind: output, shape index: {0}]
  %s3 = inlined_call_operand.hbm [shape: f32[2,128], index: 3, kind: output, shape index: {1}]
  %4 = xla_tuple %s2, %s3
  %s5 = sld [smem:[#allocation0]]
  $region30: #{tpu_custom_call.1} parent=0
    _
  %s7 = ssub.s32 1, %s5
  %s8 = scalar_select 0, %s7, %s5
  $region1: #{tpu_custom_call.1} parent=0
    #allocation2 [shape = 'u8[512]{0}', space=vmem, size = 0x400, scoped, tag = 'input window, operand 0, single buffered']
    #allocation3 [shape = 's32[1]{0}', space=sflag, size = 0x4, scoped, tag = 'scoped memory for tpu_custom_call.1']
    #allocation4 [shape = 's32[1]{0}', space=sflag, size = 0x4, scoped, tag = 'scoped memory for tpu_custom_call.1']
    #allocation5 [shape = 'u8[1024]{0}', space=vmem, size = 0x400, scoped, tag = 'output window, operand 0, single buffered']
    #allocation6 [shape = 'u8[1024]{0}', space=vmem, size = 0x400, scoped, tag = 'output window, operand 1, single buffered']
    #allocation7 [shape = 's32[1]{0}', space=sflag, size = 0x4, scoped, tag = 'scoped memory for tpu_custom_call.1']
    %9 = vsyncpa [#allocation3], 0
    %10 = vsyncpa [#allocation4], 0
    %11 = vsyncpa [#allocation7], 0
    // Predicated region
    $region2: #{tpu_custom_call.1} parent=1 // pred_check
      _
    $region3: #{tpu_custom_call.1} parent=1 // pred_check_branch
      %13 = sbr.rel (0) target = $region5
    $region4: #{tpu_custom_call.1} parent=1 // pred_region
      %s15 = ssub.s32 16, 16
      %16 = vsyncadd [#allocation3], %s15
      %s18 = sshll.u32 [#allocation2], 4
      %s19 = int_to_ptr.vmem [resolvable:$true] %s18
      %21 = dma.hbm_to_vmem [thread:$0]  %s0, 16, %s19, [#allocation3]
    $region5: #{tpu_custom_call.1} parent=1 // pred_fallthru
      _
    // Predicated region
    $region6: #{tpu_custom_call.1} parent=1 // pred_check
      _
    $region7: #{tpu_custom_call.1} parent=1 // pred_check_branch
      %23 = sbr.rel (0) target = $region9
    $region8: #{tpu_custom_call.1} parent=1 // pred_region
      _
    $region9: #{tpu_custom_call.1} parent=1 // pred_fallthru
      _
    // Predicated region
    $region10: #{tpu_custom_call.1} parent=1 // pred_check
      _
    $region11: #{tpu_custom_call.1} parent=1 // pred_check_branch
      %25 = sbr.rel (0) target = $region13
    $region12: #{tpu_custom_call.1} parent=1 // pred_region
      %26 = dma.done [#allocation3], 16
    $region13: #{tpu_custom_call.1} parent=1 // pred_fallthru
      _
    %s27 = smul.u32 0, 2
    %v28 = vlaneseq
    %v29 = vshrl.u32 %v28, 7
    %v30 = vstv %s27
    %v31 = vadd.s32 %v29, %v30
    %v32 = vcvt.s32.f32 %v31
    %v33 = vmul.f32 %v32, 8.0
    %v34 = vld [vmem:[%s1] sm:$0x1]
    %v36 = vlaneseq
    %v37 = vshrl.u32 %v36, 7
    %v38 = vsub.s32 0, %v37
    %v39 = vrot.slane %v34, %v38
    %v41 = vadd.f32 %v33, %v39
    %v42 = vld [vmem:[#allocation2] sm:$0x1]
    %v44 = vlaneseq
    %v45 = vshrl.u32 %v44, 7
    %v46 = vsub.s32 0, %v45
    %v47 = vrot.slane %v42, %v46
    %v49 = vmul.f32 %v41, %v47
    %v50 = vand.u32 2147483647, %v49
    %vm51 = vcmp.le.f32.partialorder %v50, 0.7853982
    %vm52 = vcmp.lt.s32.totalorder %v49, 0
    %v53 = vand.u32 %v49, 2139095040
    %v54 = vshrl.u32 %v53, 23
    %v55 = vsub.s32 %v54, 127
    %v56 = vand.u32 2147483647, %v49
    %v57 = vand.u32 %v56, 8388607
    %v58 = vor.u32 %v57, 8388608
    %v59 = vsub.s32 0, %v58
    %v60 = vadd.s32 %v55, 1
    %vm61 = vcmp.gt.s32.totalorder %v60, 0
    %v62 = vsel %vm61, %v60, 0
    %v63 = vshrl.u32 %v62, 5
    %v64 = vand.u32 %v62, 31
    %v65 = vsub.s32 32, %v64
    %v66 = vshrl.u32 683565275, %v65
    %v67 = vshll.u32 683565275, %v64
    %v68 = vshrl.u32 2475754826, %v65
    %v69 = vor.u32 %v67, %v68
    %v70 = vshll.u32 2475754826, %v64
    %v71 = vshrl.u32 2131351028, %v65
    %v72 = vor.u32 %v70, %v71
    %v73 = vshll.u32 2131351028, %v64
    %v74 = vshrl.u32 2102212464, %v65
    %v75 = vor.u32 %v73, %v74
    %v76 = vshll.u32 2102212464, %v64
    %v77 = vshrl.u32 920167782, %v65
    %v78 = vor.u32 %v76, %v77
    %v79 = vshll.u32 920167782, %v64
    %v80 = vshrl.u32 1326507024, %v65
    %v81 = vor.u32 %v79, %v80
    %vm82 = vcmp.lt.s32.totalorder %v63, 1
    %vm83 = vcmp.lt.s32.totalorder %v63, 2
    %vm84 = vcmp.lt.s32.totalorder %v63, 3
    %vm85 = vcmp.lt.s32.totalorder %v63, 4
    %v86 = vsel %vm82, %v66, %v69
    %v87 = vsel %vm85, %v75, 2102212464
    %v88 = vsel %vm84, %v72, %v87
    %v89 = vsel %vm83, %v86, %v88
    %v90 = vsel %vm82, %v69, %v72
    %v91 = vsel %vm85, %v78, 920167782
    %v92 = vsel %vm84, %v75, %v91
    %v93 = vsel %vm83, %v90, %v92
    %v94 = vsel %vm82, %v72, %v75
    %v95 = vsel %vm85, %v81, 1326507024
    %v96 = vsel %vm84, %v78, %v95
    %v97 = vsel %vm83, %v94, %v96
    %v98 = vshll.u32 %v58, 8
    %v99 = vmul.u32.u64.compose %v98, %v97
    %v100 = vextract.low.u32 %v99
    %v101 = vextract.high.u32 %v99
    %v102 = vmul.u32.u64.compose %v98, %v93
    %v103 = vextract.low.u32 %v102
    %v104 = vextract.high.u32 %v102
    %v105 = vmul.u32 %v98, %v89
    %v106 = vadd.s32 %v101, %v103
    %vm107 = vc.u32 %v101, %v103
    %v108 = vadd.s32 %v104, 1
    %v109 = vsel %vm107, %v108, %v104
    %v110 = vadd.s32 %v105, %v109
    %v111 = vadd.s32 %v110, 536870912
    %v112 = vshrl.u32 %v111, 30
    %v113 = vshll.u32 %v112, 30
    %v114 = vsub.s32 %v110, %v113
    %vm115 = vcmp.lt.s32.totalorder %v114, 0
    %v116 = vsub.s32 0, %v114
    %v117 = vsel %vm115, %v116, %v114
    %v118 = vclz %v117
    %v119 = vsub.s32 %v118, 2
    %vm120 = vcmp.gt.s32.totalorder 0, %v119
    %v121 = vsel %vm120, 0, %v119
    %v122 = vsub.s32 32, %v121
    %v123 = vshll.u32 %v114, %v121
    %v124 = vshrl.u32 %v106, %v122
    %v125 = vor.u32 %v123, %v124
    %v126 = vsub.s32 4294967266, %v121
    %v127 = vadd.s32 %v126, 127
    %v128 = vshll.u32 %v127, 23
    %v129 = vor.u32 4788187, %v128
    %v130 = vand.u32 2147483647, %v129
    %v132 = vcvt.s32.f32 %v125
    %v133 = vmul.f32 %v132, %v130
    %v134 = vxor.u32 %v133, 2147483648
    %v135 = vsel %vm52, %v134, %v133
    %v136 = vsub.s32 4, %v112
    %v137 = vsel %vm52, %v136, %v112
    %v138 = vsel %vm51, %v49, %v135
    %v139 = vsel %vm51, 0, %v137
    %v140 = vcosq.f32.pop %v138
    %v141 = vsinq.f32.pop %v138
    %vm142 = vweird.f32 %v49
    %v143 = vadd.s32 %v139, 3
    %v144 = vand.u32 %v143, 3
    %vm145 = vcmp.lt.s32.totalorder %v144, 2
    %vm146 = vcmp.eq.s32.totalorder %v144, 0
    %v147 = vxor.u32 %v141, 2147483648
    %v148 = vsel %vm146, %v140, %v147
    %vm149 = vcmp.eq.s32.totalorder %v144, 2
    %v150 = vxor.u32 %v140, 2147483648
    %v151 = vsel %vm149, %v150, %v141
    %v152 = vsel %vm145, %v148, %v151
    %v153 = vsel %vm142, nan, %v152
    %154 = vst [vmem:[#allocation5] sm:$0x3] %v153
    %v155 = vand.u32 2147483647, %v49
    %vm156 = vcmp.le.f32.partialorder %v155, 0.7853982
    %vm157 = vcmp.lt.s32.totalorder %v49, 0
    %v158 = vand.u32 %v49, 2139095040
    %v159 = vshrl.u32 %v158, 23
    %v160 = vsub.s32 %v159, 127
    %v161 = vand.u32 2147483647, %v49
    %v162 = vand.u32 %v161, 8388607
    %v163 = vor.u32 %v162, 8388608
    %v164 = vsub.s32 0, %v163
    %v165 = vadd.s32 %v160, 1
    %vm166 = vcmp.gt.s32.totalorder %v165, 0
    %v167 = vsel %vm166, %v165, 0
    %v168 = vshrl.u32 %v167, 5
    %v169 = vand.u32 %v167, 31
    %v170 = vsub.s32 32, %v169
    %v171 = vshrl.u32 683565275, %v170
    %v172 = vshll.u32 683565275, %v169
    %v173 = vshrl.u32 2475754826, %v170
    %v174 = vor.u32 %v172, %v173
    %v175 = vshll.u32 2475754826, %v169
    %v176 = vshrl.u32 2131351028, %v170
    %v177 = vor.u32 %v175, %v176
    %v178 = vshll.u32 2131351028, %v169
    %v179 = vshrl.u32 2102212464, %v170
    %v180 = vor.u32 %v178, %v179
    %v181 = vshll.u32 2102212464, %v169
    %v182 = vshrl.u32 920167782, %v170
    %v183 = vor.u32 %v181, %v182
    %v184 = vshll.u32 920167782, %v169
    %v185 = vshrl.u32 1326507024, %v170
    %v186 = vor.u32 %v184, %v185
    %vm187 = vcmp.lt.s32.totalorder %v168, 1
    %vm188 = vcmp.lt.s32.totalorder %v168, 2
    %vm189 = vcmp.lt.s32.totalorder %v168, 3
    %vm190 = vcmp.lt.s32.totalorder %v168, 4
    %v191 = vsel %vm187, %v171, %v174
    %v192 = vsel %vm190, %v180, 2102212464
    %v193 = vsel %vm189, %v177, %v192
    %v194 = vsel %vm188, %v191, %v193
    %v195 = vsel %vm187, %v174, %v177
    %v196 = vsel %vm190, %v183, 920167782
    %v197 = vsel %vm189, %v180, %v196
    %v198 = vsel %vm188, %v195, %v197
    %v199 = vsel %vm187, %v177, %v180
    %v200 = vsel %vm190, %v186, 1326507024
    %v201 = vsel %vm189, %v183, %v200
    %v202 = vsel %vm188, %v199, %v201
    %v203 = vshll.u32 %v163, 8
    %v204 = vmul.u32.u64.compose %v203, %v202
    %v205 = vextract.low.u32 %v204
    %v206 = vextract.high.u32 %v204
    %v207 = vmul.u32.u64.compose %v203, %v198
    %v208 = vextract.low.u32 %v207
    %v209 = vextract.high.u32 %v207
    %v210 = vmul.u32 %v203, %v194
    %v211 = vadd.s32 %v206, %v208
    %vm212 = vc.u32 %v206, %v208
    %v213 = vadd.s32 %v209, 1
    %v214 = vsel %vm212, %v213, %v209
    %v215 = vadd.s32 %v210, %v214
    %v216 = vadd.s32 %v215, 536870912
    %v217 = vshrl.u32 %v216, 30
    %v218 = vshll.u32 %v217, 30
    %v219 = vsub.s32 %v215, %v218
    %vm220 = vcmp.lt.s32.totalorder %v219, 0
    %v221 = vsub.s32 0, %v219
    %v222 = vsel %vm220, %v221, %v219
    %v223 = vclz %v222
    %v224 = vsub.s32 %v223, 2
    %vm225 = vcmp.gt.s32.totalorder 0, %v224
    %v226 = vsel %vm225, 0, %v224
    %v227 = vsub.s32 32, %v226
    %v228 = vshll.u32 %v219, %v226
    %v229 = vshrl.u32 %v211, %v227
    %v230 = vor.u32 %v228, %v229
    %v231 = vsub.s32 4294967266, %v226
    %v232 = vadd.s32 %v231, 127
    %v233 = vshll.u32 %v232, 23
    %v234 = vor.u32 4788187, %v233
    %v235 = vand.u32 2147483647, %v234
    %v237 = vcvt.s32.f32 %v230
    %v238 = vmul.f32 %v237, %v235
    %v239 = vxor.u32 %v238, 2147483648
    %v240 = vsel %vm157, %v239, %v238
    %v241 = vsub.s32 4, %v217
    %v242 = vsel %vm157, %v241, %v217
    %v243 = vsel %vm156, %v49, %v240
    %v244 = vsel %vm156, 0, %v242
    %v245 = vcosq.f32.pop %v243
    %v246 = vsinq.f32.pop %v243
    %vm247 = vweird.f32 %v49
    %v248 = vand.u32 %v244, 3
    %vm249 = vcmp.lt.s32.totalorder %v248, 2
    %vm250 = vcmp.eq.s32.totalorder %v248, 0
    %v251 = vxor.u32 %v246, 2147483648
    %v252 = vsel %vm250, %v245, %v251
    %vm253 = vcmp.eq.s32.totalorder %v248, 2
    %v254 = vxor.u32 %v245, 2147483648
    %v255 = vsel %vm253, %v254, %v246
    %v256 = vsel %vm249, %v252, %v255
    %v257 = vsel %vm247, nan, %v256
    %258 = vst [vmem:[#allocation6] sm:$0x3] %v257
    // Predicated region
    $region14: #{tpu_custom_call.1} parent=1 // pred_check
      _
    $region15: #{tpu_custom_call.1} parent=1 // pred_check_branch
      %260 = sbr.rel (0) target = $region17
    $region16: #{tpu_custom_call.1} parent=1 // pred_region
      %s262 = ssub.s32 32, 32
      %263 = vsyncadd [#allocation4], %s262
      %s265 = sshll.u32 [#allocation5], 4
      %s266 = int_to_ptr.vmem [resolvable:$true] %s265
      %268 = dma.vmem_to_hbm [thread:$0]  %s266, 32, %s2, [#allocation4]
    $region17: #{tpu_custom_call.1} parent=1 // pred_fallthru
      _
    // Predicated region
    $region18: #{tpu_custom_call.1} parent=1 // pred_check
      _
    $region19: #{tpu_custom_call.1} parent=1 // pred_check_branch
      %270 = sbr.rel (0) target = $region21
    $region20: #{tpu_custom_call.1} parent=1 // pred_region
      %s272 = ssub.s32 32, 32
      %273 = vsyncadd [#allocation7], %s272
      %s275 = sshll.u32 [#allocation6], 4
      %s276 = int_to_ptr.vmem [resolvable:$true] %s275
      %278 = dma.vmem_to_hbm [thread:$0]  %s276, 32, %s3, [#allocation7]
    $region21: #{tpu_custom_call.1} parent=1 // pred_fallthru
      _
    // Predicated region
    $region22: #{tpu_custom_call.1} parent=1 // pred_check
      _
    $region23: #{tpu_custom_call.1} parent=1 // pred_check_branch
      %280 = sbr.rel (0) target = $region25
    $region24: #{tpu_custom_call.1} parent=1 // pred_region
      %281 = dma.done [#allocation4], 32
    $region25: #{tpu_custom_call.1} parent=1 // pred_fallthru
      _
    // Predicated region
    $region26: #{tpu_custom_call.1} parent=1 // pred_check
      _
    $region27: #{tpu_custom_call.1} parent=1 // pred_check_branch
      %283 = sbr.rel (0) target = $region29
    $region28: #{tpu_custom_call.1} parent=1 // pred_region
      %284 = dma.done [#allocation7], 32
    $region29: #{tpu_custom_call.1} parent=1 // pred_fallthru
      _
    %285 = vsyncpa [#allocation3], 1
    %286 = vsyncpa [#allocation4], 1
    %287 = vsyncpa [#allocation7], 1

</llo_original>
